<compile_context>
chip_gen: v7x
topology: tpu7x:2x2x1
jax: 0.10.0
libtpu: 0.0.40
codegen_flags: <defaults>
</compile_context>

<pallas_src>
import jax
import jax.numpy as jnp
from jax.experimental import pallas as pl
from jax.experimental.pallas import tpu as pltpu


def affine_relu_kernel(wb_ref, x_ref, o_ref):
    # wb_ref: (2,) f32 scalar-prefetch ref in SMEM: [weight, bias].
    w = wb_ref[0]
    b = wb_ref[1]
    y = x_ref[...].astype(jnp.float32) * w + b
    o_ref[...] = jnp.maximum(y, 0.0).astype(o_ref.dtype)


def _round_up(x, m):
    return ((x + m - 1) // m) * m


_LANE_CHOICES = (1024, 512, 256, 128)


def conv1x1_relu(x, weight, bias, *, target_block_bytes=4 << 20,
                 small_fallback_bytes=1 << 20, force_pallas=False):
    """x: (N, 1, H, W); weight: (1, 1, 1, 1); bias: (1,)."""
    n, c, h, w_dim = x.shape
    assert c == 1, "module uses Conv2d(1, 1, 1)"
    dtype = x.dtype
    itemsize = jnp.dtype(dtype).itemsize
    total = n * c * h * w_dim

    w_scalar = weight.reshape(()).astype(jnp.float32)
    b_scalar = bias.reshape(()).astype(jnp.float32)

    def _jnp_affine_relu(v):
        return jnp.maximum(v.astype(jnp.float32) * w_scalar + b_scalar,
                           0.0).astype(dtype)

    # Tiny inputs: fused XLA elementwise beats kernel launch + plumbing.
    if not force_pallas and total * itemsize < small_fallback_bytes:
        return _jnp_affine_relu(x)

    flat = x.reshape(-1)

    # Lane width: largest multiple of 128 dividing total -> zero pad, zero
    # extra copies (the reshapes below are free on a contiguous array).
    lanes = None
    for cand in _LANE_CHOICES:
        if total % cand == 0:
            lanes = cand
            break

    tail_out = None
    if lanes is None:
        # Ragged total: kernel streams the 128-aligned prefix; the (<128
        # element) tail is finished with a trivial jnp epilogue.
        lanes = 128
        kernel_total = (total // lanes) * lanes
        tail_out = _jnp_affine_relu(flat[kernel_total:])
        flat_main = flat[:kernel_total]
    else:
        kernel_total = total
        flat_main = flat

    rows = kernel_total // lanes
    if rows == 0:
        # Degenerate (fewer than 128 elements forced through): no kernel work.
        return _jnp_affine_relu(flat).reshape(n, c, h, w_dim)

    x2 = flat_main.reshape(rows, lanes)

    # Tile sizing: ~target_block_bytes per block, rows aligned for the
    # (8,128) rule (16/32 for sub-32-bit packing), and capped at ~rows/2 so
    # the "parallel" axis has >= 2 steps to shard across v7x TensorCores.
    row_align = max(8, 32 // max(itemsize, 1))
    target_rows = max(row_align,
                      (target_block_bytes // (lanes * itemsize))
                      // row_align * row_align)
    half_rows = _round_up(pl.cdiv(rows, 2), row_align)
    tile_rows = min(target_rows, half_rows)
    if tile_rows >= rows:
        tile_rows = rows          # single full-extent block (always legal)
        grid_r = 1
    else:
        grid_r = pl.cdiv(rows, tile_rows)   # ragged last block handled by Pallas

    wb = jnp.stack([w_scalar, b_scalar])    # (2,) f32, scalar-prefetched to SMEM

    out2 = pl.pallas_call(
        affine_relu_kernel,
        out_shape=jax.ShapeDtypeStruct((rows, lanes), dtype),
        grid_spec=pltpu.PrefetchScalarGridSpec(
            num_scalar_prefetch=1,
            grid=(grid_r,),
            in_specs=[
                pl.BlockSpec((tile_rows, lanes), lambda i, wb_ref: (i, 0)),
            ],
            out_specs=pl.BlockSpec((tile_rows, lanes), lambda i, wb_ref: (i, 0)),
        ),
        compiler_params=pltpu.CompilerParams(
            dimension_semantics=("parallel",),
            vmem_limit_bytes=32 << 20),
        cost_estimate=pl.CostEstimate(
            flops=2 * kernel_total,
            transcendentals=0,
            bytes_accessed=2 * kernel_total * itemsize),
    )(wb, x2)

    out_flat = out2.reshape(-1)
    if tail_out is not None:
        out_flat = jnp.concatenate([out_flat, tail_out])
    return out_flat.reshape(n, c, h, w_dim)


if __name__ == "__main__":
    key = jax.random.PRNGKey(0)
    kx, kw, kb = jax.random.split(key, 3)

    # Conv2d(1, 1, 1) parameters: weight (1, 1, 1, 1), bias (1,).
    weight = jax.random.normal(kw, (1, 1, 1, 1), dtype=jnp.float32)
    bias = jax.random.normal(kb, (1,), dtype=jnp.float32)
    w0 = weight[0, 0, 0, 0]
    b0 = bias[0]

    # Small NCHW input consistent with the module: N=2, C=1, H=W=16.
    x_small = jax.random.normal(kx, (2, 1, 16, 16), dtype=jnp.float32)
    ref_small = jnp.maximum(x_small * w0 + b0, 0.0)

    # 1) Default wrapper on the tiny input (takes the fused-XLA fallback).
    out_small = jax.block_until_ready(conv1x1_relu(x_small, weight, bias))
    assert out_small.shape == (2, 1, 16, 16)
    assert jnp.allclose(out_small, ref_small, atol=1e-6), "mismatch (small)"

    # 2) Force the Pallas kernel on the same tiny input (single-block path).
    out_small_k = jax.block_until_ready(
        conv1x1_relu(x_small, weight, bias, force_pallas=True))
    assert jnp.allclose(out_small_k, ref_small, atol=1e-6), "mismatch (small, pallas)"

    # 3) Medium feature map -> natural kernel path, >=2 grid steps, no pad/slice.
    x_med = jax.random.normal(kx, (2, 1, 512, 512), dtype=jnp.float32)
    out_med = jax.block_until_ready(conv1x1_relu(x_med, weight, bias))
    ref_med = jnp.maximum(x_med * w0 + b0, 0.0)
    assert jnp.allclose(out_med, ref_med, atol=1e-6), "mismatch (medium)"

    # 4) Ragged element count (not a multiple of 128) -> kernel prefix + jnp tail.
    x_rag = jax.random.normal(kx, (1, 1, 100, 100), dtype=jnp.float32)
    out_rag = jax.block_until_ready(
        conv1x1_relu(x_rag, weight, bias, force_pallas=True))
    ref_rag = jnp.maximum(x_rag * w0 + b0, 0.0)
    assert jnp.allclose(out_rag, ref_rag, atol=1e-6), "mismatch (ragged)"

    print("KERNEL_OK")
</pallas_src>

<mosaic_0001>
module attributes {stable_mosaic.version = 11 : i64} {
  func.func @affine_relu_kernel(%arg0: i32, %arg1: memref<2xf32, #tpu.memory_space<smem>>, %arg2: memref<1x512xf32, #tpu.memory_space<vmem>>, %arg3: memref<1x512xf32, #tpu.memory_space<vmem>>) attributes {dimension_semantics = [#tpu.dimension_semantics<parallel>], iteration_bounds = array<i64: 1>, scalar_prefetch = 1 : i64, scratch_operands = 0 : i64, tpu.core_type = #tpu.core_type<tc>, window_params = [{transform_indices = @transform_0, window_bounds = array<i64: 1, 512>}, {transform_indices = @transform_1, window_bounds = array<i64: 1, 512>}]} {
    %c0 = arith.constant 0 : index
    %0 = memref.load %arg1[%c0] : memref<2xf32, #tpu.memory_space<smem>>
    %c1 = arith.constant 1 : index
    %1 = memref.load %arg1[%c1] : memref<2xf32, #tpu.memory_space<smem>>
    %c0_0 = arith.constant 0 : index
    %c0_1 = arith.constant 0 : index
    %2 = vector.load %arg2[%c0_0, %c0_1] : memref<1x512xf32, #tpu.memory_space<vmem>>, vector<1x512xf32>
    %3 = vector.broadcast %0 : f32 to vector<1x512xf32>
    %4 = arith.mulf %2, %3 : vector<1x512xf32>
    %5 = vector.broadcast %1 : f32 to vector<1x512xf32>
    %6 = arith.addf %4, %5 : vector<1x512xf32>
    %cst = arith.constant 0.000000e+00 : f32
    %7 = vector.broadcast %cst : f32 to vector<1x512xf32>
    %8 = arith.maximumf %6, %7 : vector<1x512xf32>
    %c0_2 = arith.constant 0 : index
    %c0_3 = arith.constant 0 : index
    %9 = vector.load %arg3[%c0_2, %c0_3] : memref<1x512xf32, #tpu.memory_space<vmem>>, vector<1x512xf32>
    tpu.vector_store %arg3[%c0_2, %c0_3], %8 {strides = array<i32>} : memref<1x512xf32, #tpu.memory_space<vmem>>, vector<1x512xf32>,
    return
  }
  func.func @transform_0(%arg0: i32, %arg1: memref<2xf32, #tpu.memory_space<smem>>) -> (i32, i32) {
    %c0_i32 = arith.constant 0 : i32
    %c0_i32_0 = arith.constant 0 : i32
    return %arg0, %c0_i32 : i32, i32
  }
  func.func @transform_1(%arg0: i32, %arg1: memref<2xf32, #tpu.memory_space<smem>>) -> (i32, i32) {
    %c0_i32 = arith.constant 0 : i32
    %c0_i32_0 = arith.constant 0 : i32
    return %arg0, %c0_i32 : i32, i32
  }
}

</mosaic_0001>

<llo_original>
// kernel: tpu_custom_call.1
$region0: #{tpu_custom_call.1}
  #allocation0 [shape = 'u32[]', space=smem, size = 0x4, offset = 0x4, fixed_abs, tag = 'smem constant byte address 0x4 - core index']
  #allocation1 [shape = 'u32[144,128]{1,0:T(1,128)}', space=vmem, size = 0x12000, scoped, tag = 'internal scratch']
  #allocation2 [shape = 's32[1]{0}', space=sflag, size = 0x4, scoped, tag = 'scoped memory for tpu_custom_call.1']
  #allocation3 [shape = 'u8[512]{0}', space=smem, size = 0x200, scoped, tag = 'prefetched SMEM operand 0']
  %s0 = inlined_call_operand.hbm [shape: f32[2], index: 0, kind: input, shape index: {}]
  %s1 = inlined_call_operand.hbm [shape: f32[1,512], index: 1, kind: input, shape index: {}]
  %s2 = inlined_call_operand.hbm [shape: f32[1,512], index: 2, kind: output, shape index: {}]
  %s3 = sld [smem:[#allocation0]]
  $region18: #{tpu_custom_call.1} parent=0
    _
  %s5 = ssub.s32 1, %s3
  %s6 = scalar_select 0, %s5, %s3
  %8 = dma.hbm_to_smem %s0, 16, [#allocation3], [#allocation2]
  %9 = dma.done [#allocation2], 16
  %10 = sfence
  $region1: #{tpu_custom_call.1} parent=0
    #allocation4 [shape = 'u8[2048]{0}', space=vmem, size = 0x800, scoped, tag = 'input window, operand 1, single buffered']
    #allocation5 [shape = 's32[1]{0}', space=sflag, size = 0x4, scoped, tag = 'scoped memory for tpu_custom_call.1']
    #allocation6 [shape = 's32[1]{0}', space=sflag, size = 0x4, scoped, tag = 'scoped memory for tpu_custom_call.1']
    #allocation7 [shape = 'u8[2048]{0}', space=vmem, size = 0x800, scoped, tag = 'output window, operand 0, single buffered']
    %11 = vsyncpa [#allocation5], 0
    %12 = vsyncpa [#allocation6], 0
    // Predicated region
    $region2: #{tpu_custom_call.1} parent=1 // pred_check
      _
    $region3: #{tpu_custom_call.1} parent=1 // pred_check_branch
      %14 = sbr.rel (0) target = $region5
    $region4: #{tpu_custom_call.1} parent=1 // pred_region
      %s16 = ssub.s32 64, 64
      %17 = vsyncadd [#allocation5], %s16
      %s19 = sshll.u32 [#allocation4], 4
      %s20 = int_to_ptr.vmem [resolvable:$true] %s19
      %22 = dma.hbm_to_vmem [thread:$0]  %s1, 64, %s20, [#allocation5]
    $region5: #{tpu_custom_call.1} parent=1 // pred_fallthru
      _
    // Predicated region
    $region6: #{tpu_custom_call.1} parent=1 // pred_check
      _
    $region7: #{tpu_custom_call.1} parent=1 // pred_check_branch
      %24 = sbr.rel (0) target = $region9
    $region8: #{tpu_custom_call.1} parent=1 // pred_region
      %25 = dma.done [#allocation5], 64
    $region9: #{tpu_custom_call.1} parent=1 // pred_fallthru
      _
    %s26 = sld [smem:[#allocation3]]
    %s27 = sld [smem:[#allocation3 + $0x1]]
    %v28 = vld [vmem:[#allocation4] sm:$0xf]
    %v29 = vstv %s26
    %v30 = vmul.f32 %v28, %v29
    %v31 = vstv %s27
    %v32 = vadd.f32 %v30, %v31
    %v33 = vmax.f32 %v32, 0.0
    %v34 = vlaneseq
    %vm35 = vcmp.ge.s32.totalorder %v34, 0
    %vm36 = vcmp.lt.s32.totalorder %v34, 512
    %vm37 = vmand %vm35, %vm36
    %38 = vst.msk [vmem:[#allocation7] sm:$0xf] %vm37, %v33
    // Predicated region
    $region10: #{tpu_custom_call.1} parent=1 // pred_check
      _
    $region11: #{tpu_custom_call.1} parent=1 // pred_check_branch
      %40 = sbr.rel (0) target = $region13
    $region12: #{tpu_custom_call.1} parent=1 // pred_region
      %s42 = ssub.s32 64, 64
      %43 = vsyncadd [#allocation6], %s42
      %s45 = sshll.u32 [#allocation7], 4
      %s46 = int_to_ptr.vmem [resolvable:$true] %s45
      %48 = dma.vmem_to_hbm [thread:$0]  %s46, 64, %s2, [#allocation6]
    $region13: #{tpu_custom_call.1} parent=1 // pred_fallthru
      _
    // Predicated region
    $region14: #{tpu_custom_call.1} parent=1 // pred_check
      _
    $region15: #{tpu_custom_call.1} parent=1 // pred_check_branch
      %50 = sbr.rel (0) target = $region17
    $region16: #{tpu_custom_call.1} parent=1 // pred_region
      %51 = dma.done [#allocation6], 64
    $region17: #{tpu_custom_call.1} parent=1 // pred_fallthru
      _
    %52 = vsyncpa [#allocation5], 1
    %53 = vsyncpa [#allocation6], 1

</llo_original>
